<compile_context>
chip_gen: v7x
topology: tpu7x:2x2x1
jax: 0.10.0
libtpu: 0.0.40
codegen_flags: <defaults>
</compile_context>

<pallas_src>
import jax
import jax.numpy as jnp
from jax.experimental import pallas as pl
from jax.experimental.pallas import tpu as pltpu


def _round_up(n, m):
    return (n + m - 1) // m * m


def _logreg_kernel(x_ref, w_ref, b_ref, o_ref):
    # x_ref: (TBp, RW)   VMEM  -- RW = PACK*F, PACK samples packed per row
    # w_ref: (RW, PACK)  VMEM  -- block-diagonal weight, resident across steps
    # b_ref: (1,)        SMEM  -- scalar bias
    # o_ref: (TBp, PACK) VMEM
    # Grouped dot on the MXU: z[r, k] = <x_sample[PACK*r + k, :], w>
    z = jnp.dot(x_ref[...], w_ref[...], preferred_element_type=jnp.float32)
    z = z + b_ref[0]                       # scalar bias straight from SMEM
    o_ref[...] = jax.nn.sigmoid(z).astype(o_ref.dtype)   # EUP (exp + recip)


def logistic_forward(x, w, b, *, block_rows=None):
    """sigmoid(x @ w.T + b)  --  PyTorch nn.Linear(F, 1) + sigmoid.

    x: (B, F) f32;  w: (1, F) f32;  b: (1,) f32;  returns (B, 1) f32.
    """
    B, F = x.shape
    assert w.shape == (1, F) and b.shape == (1,)

    # Pack PACK consecutive samples into one 128-lane row when F divides 128
    # (free, contiguous reshape); otherwise fall back to PACK = 1.
    PACK = (128 // F) if (F <= 128 and 128 % F == 0) else 1
    RW = PACK * F

    # Pad the batch so it packs cleanly and the packed row count is a multiple
    # of the 8-sublane tile (only copies x when B is not already aligned).
    B_pad = _round_up(max(B, 1), PACK * 8)
    if B_pad != B:
        x = jnp.pad(x, ((0, B_pad - B), (0, 0)))
    Bp = B_pad // PACK
    x_packed = x.reshape(Bp, RW)

    # Block-diagonal weight (RW, PACK): column k holds w in rows k*F .. k*F+F.
    w_blk = jnp.kron(jnp.eye(PACK, dtype=w.dtype), w.reshape(F, 1))

    # Tile size: 4096 packed rows (= 16384 samples at F=32, ~2 MiB f32 tile)
    # amortizes per-step overhead; keep >= 4 grid steps for large batches so
    # the "parallel" axis actually splits across v7x's two TensorCores.
    if block_rows is None:
        tbp = min(4096, _round_up(pl.cdiv(Bp, 4), 8))
    else:
        tbp = _round_up(block_rows, 8)
    tbp = max(8, min(tbp, Bp))
    grid = (pl.cdiv(Bp, tbp),)

    out = pl.pallas_call(
        _logreg_kernel,
        out_shape=jax.ShapeDtypeStruct((Bp, PACK), x.dtype),
        grid=grid,
        in_specs=[
            pl.BlockSpec((tbp, RW), lambda i: (i, 0)),            # x: batch-tiled, lane-dense
            pl.BlockSpec((RW, PACK), lambda i: (0, 0)),           # w: resident across steps
            pl.BlockSpec(memory_space=pltpu.MemorySpace.SMEM),    # b: scalar in SMEM
        ],
        out_specs=pl.BlockSpec((tbp, PACK), lambda i: (i, 0)),
        compiler_params=pltpu.CompilerParams(
            dimension_semantics=("parallel",),   # shard batch tiles across v7x's 2 TCs
        ),
    )(x_packed, w_blk, b)

    return out.reshape(B_pad, 1)[:B]


if __name__ == "__main__":
    key = jax.random.PRNGKey(0)
    kx, kw, kb = jax.random.split(key, 3)

    batch = 8
    n_input_features = 32

    # Parameters mimicking torch.nn.Linear(n_input_features, 1)
    # (uniform(-1/sqrt(F), 1/sqrt(F)); weight (1, F), bias (1,)).
    bound = 1.0 / jnp.sqrt(jnp.float32(n_input_features))
    w = jax.random.uniform(kw, (1, n_input_features), jnp.float32, -bound, bound)
    b = jax.random.uniform(kb, (1,), jnp.float32, -bound, bound)
    x = jax.random.normal(kx, (batch, n_input_features), jnp.float32)

    y = jax.block_until_ready(logistic_forward(x, w, b))
    y_ref = jax.nn.sigmoid(x @ w.T + b)
    assert y.shape == (batch, 1)
    assert jnp.allclose(y, y_ref, atol=1e-5, rtol=1e-5)

    # Multi-step grid + ragged final block (batch not a multiple of the tile).
    x2 = jax.random.normal(jax.random.PRNGKey(1), (100, n_input_features), jnp.float32)
    y2 = jax.block_until_ready(logistic_forward(x2, w, b, block_rows=24))
    y2_ref = jax.nn.sigmoid(x2 @ w.T + b)
    assert y2.shape == (100, 1)
    assert jnp.allclose(y2, y2_ref, atol=1e-5, rtol=1e-5)

    # Feature count that does not divide 128 (PACK=1 fallback path).
    f3 = 20
    w3 = jax.random.uniform(jax.random.PRNGKey(2), (1, f3), jnp.float32, -bound, bound)
    b3 = jax.random.uniform(jax.random.PRNGKey(3), (1,), jnp.float32, -bound, bound)
    x3 = jax.random.normal(jax.random.PRNGKey(4), (16, f3), jnp.float32)
    y3 = jax.block_until_ready(logistic_forward(x3, w3, b3))
    y3_ref = jax.nn.sigmoid(x3 @ w3.T + b3)
    assert y3.shape == (16, 1)
    assert jnp.allclose(y3, y3_ref, atol=1e-5, rtol=1e-5)

    print("KERNEL_OK")
</pallas_src>

<mosaic_0001>
module attributes {stable_mosaic.version = 11 : i64} {
  func.func @_logreg_kernel(%arg0: i32, %arg1: memref<8x128xf32, #tpu.memory_space<vmem>>, %arg2: memref<128x4xf32, #tpu.memory_space<vmem>>, %arg3: memref<1xf32, #tpu.memory_space<smem>>, %arg4: memref<8x4xf32, #tpu.memory_space<vmem>>) attributes {dimension_semantics = [#tpu.dimension_semantics<parallel>], iteration_bounds = array<i64: 1>, scalar_prefetch = 0 : i64, scratch_operands = 0 : i64, tpu.core_type = #tpu.core_type<tc>, window_params = [{transform_indices = @transform_0, window_bounds = array<i64: 8, 128>}, {pipeline_mode = #tpu.pipeline_mode<synchronous>, transform_indices = @transform_1, window_bounds = array<i64: 128, 4>}, {transform_indices = @transform_2, window_bounds = array<i64: 1>}, {transform_indices = @transform_3, window_bounds = array<i64: 8, 4>}]} {
    %c0 = arith.constant 0 : index
    %c0_0 = arith.constant 0 : index
    %0 = vector.load %arg1[%c0, %c0_0] : memref<8x128xf32, #tpu.memory_space<vmem>>, vector<8x128xf32>
    %c0_1 = arith.constant 0 : index
    %c0_2 = arith.constant 0 : index
    %1 = vector.load %arg2[%c0_1, %c0_2] : memref<128x4xf32, #tpu.memory_space<vmem>>, vector<128x4xf32>
    %cst = arith.constant dense<0.000000e+00> : vector<8x4xf32>
    %2 = tpu.matmul %0, %1, %cst {dimension_numbers = #tpu.dot_dimension_numbers<[1], [0], [0], [1], [0, 0, 1, 1], [], []>} : vector<8x128xf32>, vector<128x4xf32>, vector<8x4xf32> -> vector<8x4xf32>
    %c0_3 = arith.constant 0 : index
    %3 = memref.load %arg3[%c0_3] : memref<1xf32, #tpu.memory_space<smem>>
    %4 = vector.broadcast %3 : f32 to vector<8x4xf32>
    %5 = arith.addf %2, %4 : vector<8x4xf32>
    %6 = arith.negf %5 : vector<8x4xf32>
    %7 = math.exp %6 : vector<8x4xf32>
    %cst_4 = arith.constant 1.000000e+00 : f32
    %8 = vector.broadcast %cst_4 : f32 to vector<8x4xf32>
    %9 = arith.addf %8, %7 : vector<8x4xf32>
    %10 = arith.divf %8, %9 : vector<8x4xf32>
    %c0_5 = arith.constant 0 : index
    %c0_6 = arith.constant 0 : index
    %11 = vector.load %arg4[%c0_5, %c0_6] : memref<8x4xf32, #tpu.memory_space<vmem>>, vector<8x4xf32>
    tpu.vector_store %arg4[%c0_5, %c0_6], %10 {strides = array<i32>} : memref<8x4xf32, #tpu.memory_space<vmem>>, vector<8x4xf32>,
    return
  }
  func.func @transform_0(%arg0: i32) -> (i32, i32) {
    %c0_i32 = arith.constant 0 : i32
    %c0_i32_0 = arith.constant 0 : i32
    return %arg0, %c0_i32 : i32, i32
  }
  func.func @transform_1(%arg0: i32) -> (i32, i32) {
    %c0_i32 = arith.constant 0 : i32
    %c0_i32_0 = arith.constant 0 : i32
    %c0_i32_1 = arith.constant 0 : i32
    return %c0_i32, %c0_i32_0 : i32, i32
  }
  func.func @transform_2(%arg0: i32) -> i32 {
    %c0_i32 = arith.constant 0 : i32
    %c0_i32_0 = arith.constant 0 : i32
    return %c0_i32 : i32
  }
  func.func @transform_3(%arg0: i32) -> (i32, i32) {
    %c0_i32 = arith.constant 0 : i32
    %c0_i32_0 = arith.constant 0 : i32
    return %arg0, %c0_i32 : i32, i32
  }
}

</mosaic_0001>

<llo_original>
// kernel: tpu_custom_call.1
$region0: #{tpu_custom_call.1}
  #allocation0 [shape = 'u32[]', space=smem, size = 0x4, offset = 0x4, fixed_abs, tag = 'smem constant byte address 0x4 - core index']
  #allocation1 [shape = 'u32[144,128]{1,0:T(1,128)}', space=vmem, size = 0x12000, scoped, tag = 'internal scratch']
  #allocation2 [shape = 'f32[1]{0:T(128)S(6)}', space=smem, size = 0x200, scoped, tag = 'scoped memory for tpu_custom_call.1']
  %s0 = inlined_call_operand.vmem [shape: f32[8,128], index: 0, kind: input, shape index: {}]
  %s1 = inlined_call_operand.vmem [shape: f32[128,4], index: 1, kind: input, shape index: {}]
  %s2 = inlined_call_operand.<no memory space> [shape: f32[1], index: 2, kind: input, shape index: {}]
  %s3 = inlined_call_operand.vmem [shape: f32[8,4], index: 3, kind: output, shape index: {}]
  %s4 = sld [smem:[#allocation0]]
  $region22: #{tpu_custom_call.1} parent=0
    _
  %s6 = ssub.s32 1, %s4
  %s7 = scalar_select 0, %s6, %s4
  %8 = sst [smem:[#allocation2]] %s2
  // Predicated region
  $region2: #{tpu_custom_call.1} parent=0 // pred_check
    _
  $region3: #{tpu_custom_call.1} parent=0 // pred_check_branch
    %10 = sbr.rel (0) target = $region5
  $region4: #{tpu_custom_call.1} parent=0 // pred_region
    _
  $region5: #{tpu_custom_call.1} parent=0 // pred_fallthru
    _
  // Predicated region
  $region6: #{tpu_custom_call.1} parent=0 // pred_check
    _
  $region7: #{tpu_custom_call.1} parent=0 // pred_check_branch
    %12 = sbr.rel (0) target = $region9
  $region8: #{tpu_custom_call.1} parent=0 // pred_region
    _
  $region9: #{tpu_custom_call.1} parent=0 // pred_fallthru
    _
  // Predicated region
  $region10: #{tpu_custom_call.1} parent=0 // pred_check
    _
  $region11: #{tpu_custom_call.1} parent=0 // pred_check_branch
    %14 = sbr.rel (0) target = $region13
  $region12: #{tpu_custom_call.1} parent=0 // pred_region
    _
  $region13: #{tpu_custom_call.1} parent=0 // pred_fallthru
    _
  %v15 = vld [vmem:[%s0] sm:$0xff]
  %v16 = vld [vmem:[%s1] sm:$0xff]
  %v17 = vld [vmem:[%s1 + $0x8] sm:$0xff]
  %v18 = vld [vmem:[%s1 + $0x10] sm:$0xff]
  %v19 = vld [vmem:[%s1 + $0x18] sm:$0xff]
  %v20 = vld [vmem:[%s1 + $0x20] sm:$0xff]
  %v21 = vld [vmem:[%s1 + $0x28] sm:$0xff]
  %v22 = vld [vmem:[%s1 + $0x30] sm:$0xff]
  %v23 = vld [vmem:[%s1 + $0x38] sm:$0xff]
  %v24 = vld [vmem:[%s1 + $0x40] sm:$0xff]
  %v25 = vld [vmem:[%s1 + $0x48] sm:$0xff]
  %v26 = vld [vmem:[%s1 + $0x50] sm:$0xff]
  %v27 = vld [vmem:[%s1 + $0x58] sm:$0xff]
  %v28 = vld [vmem:[%s1 + $0x60] sm:$0xff]
  %v29 = vld [vmem:[%s1 + $0x68] sm:$0xff]
  %v30 = vld [vmem:[%s1 + $0x70] sm:$0xff]
  %v31 = vld [vmem:[%s1 + $0x78] sm:$0xff]
  %s32 = sld [smem:[#allocation2]]
  %v33 = vstv %s32
  %34 = vmatprep.subr.mxu0 0.0
  %35 = vmatpush1.msra.mxu0 %v16
  %36 = vmatprep.subr.mxu0 0.0
  %37 = vmatpush1.msra.mxu0 %v17
  %38 = vmatprep.subr.mxu0 0.0
  %39 = vmatpush1.msra.mxu0 %v18
  %40 = vmatprep.subr.mxu0 0.0
  %41 = vmatpush1.msra.mxu0 %v19
  %42 = vmatprep.subr.mxu0 0.0
  %43 = vmatpush1.msra.mxu0 %v20
  %44 = vmatprep.subr.mxu0 0.0
  %45 = vmatpush1.msra.mxu0 %v21
  %46 = vmatprep.subr.mxu0 0.0
  %47 = vmatpush1.msra.mxu0 %v22
  %48 = vmatprep.subr.mxu0 0.0
  %49 = vmatpush1.msra.mxu0 %v23
  %50 = vmatprep.subr.mxu0 0.0
  %51 = vmatpush1.msra.mxu0 %v24
  %52 = vmatprep.subr.mxu0 0.0
  %53 = vmatpush1.msra.mxu0 %v25
  %54 = vmatprep.subr.mxu0 0.0
  %55 = vmatpush1.msra.mxu0 %v26
  %56 = vmatprep.subr.mxu0 0.0
  %57 = vmatpush1.msra.mxu0 %v27
  %58 = vmatprep.subr.mxu0 0.0
  %59 = vmatpush1.msra.mxu0 %v28
  %60 = vmatprep.subr.mxu0 0.0
  %61 = vmatpush1.msra.mxu0 %v29
  %62 = vmatprep.subr.mxu0 0.0
  %63 = vmatpush1.msra.mxu0 %v30
  %64 = vmatprep.subr.mxu0 0.0
  %65 = vmatpush1.msra.mxu0 %v31
  %66 = vmatprep.subr.mxu0 0.0
  %67 = vmatpush1.msra.mxu0 0.0
  %68 = vmatprep.subr.mxu0 0.0
  %69 = vmatpush1.msra.mxu0 0.0
  %70 = vmatprep.subr.mxu0 0.0
  %71 = vmatpush1.msra.mxu0 0.0
  %72 = vmatprep.subr.mxu0 0.0
  %73 = vmatpush1.msra.mxu0 0.0
  %74 = vmatprep.subr.mxu0 0.0
  %75 = vmatpush1.msra.mxu0 0.0
  %76 = vmatprep.subr.mxu0 0.0
  %77 = vmatpush1.msra.mxu0 0.0
  %78 = vmatprep.subr.mxu0 0.0
  %79 = vmatpush1.msra.mxu0 0.0
  %80 = vmatprep.subr.mxu0 0.0
  %81 = vmatpush1.msra.mxu0 0.0
  %82 = vmatprep.subr.mxu0 0.0
  %83 = vmatpush1.msra.mxu0 0.0
  %84 = vmatprep.subr.mxu0 0.0
  %85 = vmatpush1.msra.mxu0 0.0
  %86 = vmatprep.subr.mxu0 0.0
  %87 = vmatpush1.msra.mxu0 0.0
  %88 = vmatprep.subr.mxu0 0.0
  %89 = vmatpush1.msra.mxu0 0.0
  %90 = vmatprep.subr.mxu0 0.0
  %91 = vmatpush1.msra.mxu0 0.0
  %92 = vmatprep.subr.mxu0 0.0
  %93 = vmatpush1.msra.mxu0 0.0
  %94 = vmatprep.subr.mxu0 0.0
  %95 = vmatpush1.msra.mxu0 0.0
  %96 = vmatprep.subr.mxu0 0.0
  %97 = vmatpush1.msra.mxu0 0.0
  %98 = vmatprep.mubr.f32.mxu0 0.0
  %99 = vmatmul.mubr.f32.gmra.mrb[0].mxu0 %v15
  %v100 = vpop.f32.mrb[0].mxu0
  %v101 = vadd.f32 %v33, %v100
  %v102 = vpop.f32.mrb[0].mxu0
  %103 = vdwg.mxu0
  %v104 = vxor.u32 %v101, 2147483648
  %v105 = vmul.f32 %v104, 1.442695
  %v106 = vpow.pop %v105
  %v107 = vadd.f32 %v106, 1.0
  %v108 = vrcp.pop %v107
  %v109 = vmul.f32 1.0, %v108
  %vm110 = vcmask 31744
  %111 = vst.msk [vmem:[%s3] sm:$0xff] %vm110, %v109
  // Predicated region
  $region14: #{tpu_custom_call.1} parent=0 // pred_check
    _
  $region15: #{tpu_custom_call.1} parent=0 // pred_check_branch
    %113 = sbr.rel (0) target = $region17
  $region16: #{tpu_custom_call.1} parent=0 // pred_region
    _
  $region17: #{tpu_custom_call.1} parent=0 // pred_fallthru
    _
  // Predicated region
  $region18: #{tpu_custom_call.1} parent=0 // pred_check
    _
  $region19: #{tpu_custom_call.1} parent=0 // pred_check_branch
    %115 = sbr.rel (0) target = $region21
  $region20: #{tpu_custom_call.1} parent=0 // pred_region
    _
  $region21: #{tpu_custom_call.1} parent=0 // pred_fallthru
    _

</llo_original>
